<compile_context>
chip_gen: v5e
topology: v5e:2x2
jax: 0.10.0
libtpu: 0.0.40
codegen_flags: <defaults>
</compile_context>

<pallas_src>
import functools

import jax
import jax.numpy as jnp
from jax.experimental import pallas as pl
from jax.experimental.pallas import tpu as pltpu

EPS = 1e-6  # T5LayerNorm variance epsilon


def _default_vmem_limit_bytes():
    """Scoped-VMEM limit with headroom for Mosaic internal scratch."""
    try:
        cap = int(pltpu.get_tpu_info().vmem_capacity_bytes)
    except Exception:
        cap = 128 * 1024 * 1024  # v5e/v6e physical VMEM
    # 7/8 of physical, capped at 112 MiB: ~56 MiB on v7x (64 MiB physical),
    # ~112 MiB on v5e/v6e (128 MiB physical).
    return min((cap * 7) // 8, 112 * 1024 * 1024)


def _t5_adapter_ff_kernel(x_ref, wi_ref, wo_ref, down_ref, up_ref, o_ref,
                          *, f_chunk, n_chunks):
    # x_ref: (TILE_T, D) f32 tokens; weights are bf16 and VMEM-resident.
    x = x_ref[...]
    tile_t, d_model = x.shape

    # ---- T5LayerNorm (RMSNorm, no mean subtraction, no bias) — f32 exact ----
    # The scale weight is folded into wi in the wrapper, so only rsqrt here.
    var = jnp.mean(x * x, axis=-1, keepdims=True)
    xn_bf = (x * jax.lax.rsqrt(var + EPS)).astype(jnp.bfloat16)

    # ---- DenseReluDense: wo(relu(wi(x))) — chunked over d_ff --------------
    # bf16 MXU operands, f32 accumulation.  Chunking removes the (TILE_T, F)
    # intermediate and lets the VPU relu/cast of chunk k overlap the wi-matmul
    # of chunk k+1.  Offsets are static -> cheap static slices of the refs.
    # (dropout = identity at eval)
    ff = None
    for k in range(n_chunks):
        off = k * f_chunk
        h = jnp.dot(xn_bf, wi_ref[:, off:off + f_chunk],
                    preferred_element_type=jnp.float32)      # (TILE_T, f_chunk)
        # f32 relu then cast keeps v5e (no bf16 VALU) happy; bit-identical to
        # bf16-relu on v6e/v7x since relu commutes with rounding.
        h = jnp.maximum(h, 0.0).astype(jnp.bfloat16)
        part = jnp.dot(h, wo_ref[off:off + f_chunk, :],
                       preferred_element_type=jnp.float32)   # (TILE_T, D) f32
        ff = part if ff is None else ff + part

    # ---- Output adapter: up(relu(down(ff))) + ff ---------------------------
    # A is zero-padded to a multiple of 128 in the wrapper (exact, lane-aligned).
    a = jnp.dot(ff.astype(jnp.bfloat16), down_ref[...],
                preferred_element_type=jnp.float32)           # (TILE_T, A_pad)
    a = jnp.maximum(a, 0.0).astype(jnp.bfloat16)
    ad = jnp.dot(a, up_ref[...],
                 preferred_element_type=jnp.float32)          # (TILE_T, D) f32

    # ---- adapter skip (ff) + residual_input (original hidden) — f32 --------
    o_ref[...] = (ad + ff + x).astype(o_ref.dtype)


def prepare_t5_adapter_ff_params(ln_w, wi, wo, a_down, a_up):
    """One-time parameter preparation (call at weight-load time, not per step):
       fold LayerNorm scale into wi, zero-pad adapter dim A to a multiple of
       128, and cast all matmul weights to bf16."""
    A = a_down.shape[1]
    a_pad = max(128, ((A + 127) // 128) * 128)
    if a_pad != A:
        a_down = jnp.pad(a_down, ((0, 0), (0, a_pad - A)))
        a_up = jnp.pad(a_up, ((0, a_pad - A), (0, 0)))
    wi_folded = (ln_w.astype(jnp.float32)[:, None] * wi.astype(jnp.float32))
    return {
        "wi": wi_folded.astype(jnp.bfloat16),
        "wo": wo.astype(jnp.bfloat16),
        "a_down": a_down.astype(jnp.bfloat16),
        "a_up": a_up.astype(jnp.bfloat16),
    }


@functools.partial(jax.jit,
                   static_argnames=("tile_t", "f_chunk", "single_buffer_weights"))
def t5_adapter_layer_ff(hidden_states, wi, wo, a_down, a_up, *,
                        tile_t=512, f_chunk=None, single_buffer_weights=True):
    """hidden_states: [B, S, D] float32.  wi/wo/a_down/a_up: bf16 params from
    prepare_t5_adapter_ff_params (ln scale folded into wi, A padded).
    Returns [B, S, D] float32."""
    B, S, D = hidden_states.shape
    F = wi.shape[1]
    A = a_down.shape[1]          # already padded
    T = B * S

    x2d = hidden_states.reshape(T, D)

    # Token tile: full slab if it fits, otherwise MXU-aligned (multiple of 128;
    # multiples of 8 only for tiny test shapes).
    if tile_t >= T:
        tile_t = T
    elif tile_t >= 128:
        tile_t = (tile_t // 128) * 128
    else:
        tile_t = max(8, (tile_t // 8) * 8)
    grid = (pl.cdiv(T, tile_t),)

    # d_ff chunk for the chained wi/wo matmuls (multiple of 128 when possible).
    if f_chunk is None:
        f_chunk = 512 if F % 512 == 0 else F
    if F % f_chunk != 0:
        f_chunk = F
    n_chunks = F // f_chunk

    # Weights never change across grid steps -> single-buffer them.
    weight_mode = pl.Buffered(1) if single_buffer_weights else None

    x_spec = pl.BlockSpec((tile_t, D), lambda i: (i, 0))
    out_spec = pl.BlockSpec((tile_t, D), lambda i: (i, 0))
    wi_spec = pl.BlockSpec((D, F), lambda i: (0, 0), pipeline_mode=weight_mode)
    wo_spec = pl.BlockSpec((F, D), lambda i: (0, 0), pipeline_mode=weight_mode)
    down_spec = pl.BlockSpec((D, A), lambda i: (0, 0), pipeline_mode=weight_mode)
    up_spec = pl.BlockSpec((A, D), lambda i: (0, 0), pipeline_mode=weight_mode)

    flops = 2 * T * (D * F + F * D + D * A + A * D)
    bytes_accessed = (
        2 * T * D * 4                          # x in + out (f32)
        + (D * F + F * D + D * A + A * D) * 2  # bf16 weights (DMA'd once)
    )
    cost = pl.CostEstimate(flops=flops, transcendentals=T,
                           bytes_accessed=bytes_accessed)

    kernel = functools.partial(_t5_adapter_ff_kernel,
                               f_chunk=f_chunk, n_chunks=n_chunks)

    # TODO(synk): for T5-XL/XXL d_ff where wi+wo bf16 exceed ~40 MiB (v7x VMEM),
    # add an "arbitrary" grid axis streaming (D, TILE_F)/(TILE_F, D) weight
    # tiles into an f32 ff accumulator with a pl.when epilogue for the adapter.
    out = pl.pallas_call(
        kernel,
        out_shape=jax.ShapeDtypeStruct((T, D), jnp.float32),
        grid=grid,
        in_specs=[x_spec, wi_spec, wo_spec, down_spec, up_spec],
        out_specs=out_spec,
        compiler_params=pltpu.CompilerParams(
            dimension_semantics=("parallel",),
            vmem_limit_bytes=_default_vmem_limit_bytes(),
        ),
        cost_estimate=cost,
    )(x2d, wi, wo, a_down, a_up)
    return out.reshape(B, S, D)


def _reference(hidden_states, ln_w, wi, wo, a_down, a_up):
    x = hidden_states
    var = jnp.mean(x * x, axis=-1, keepdims=True)
    xn = x * jax.lax.rsqrt(var + EPS) * ln_w
    ff = jnp.maximum(xn @ wi, 0.0) @ wo
    ad = jnp.maximum(ff @ a_down, 0.0) @ a_up
    return ad + ff + x


if __name__ == "__main__":
    # Small deterministic config consistent with the module:
    #   d_model = 32 (hidden_size), d_ff = 64, adapter_size = 16
    B, S, D, F, A = 2, 8, 32, 64, 16
    key = jax.random.PRNGKey(0)
    k = jax.random.split(key, 6)

    hidden = jax.random.normal(k[0], (B, S, D), dtype=jnp.float32)
    ln_w = jnp.ones((D,), jnp.float32) + 0.01 * jax.random.normal(k[1], (D,), jnp.float32)
    wi = 0.05 * jax.random.normal(k[2], (D, F), dtype=jnp.float32)
    wo = 0.05 * jax.random.normal(k[3], (F, D), dtype=jnp.float32)
    a_down = 0.05 * jax.random.normal(k[4], (D, A), dtype=jnp.float32)
    a_up = 0.05 * jax.random.normal(k[5], (A, D), dtype=jnp.float32)

    # One-time parameter prep (fold LN scale, pad A, cast to bf16).
    params = prepare_t5_adapter_ff_params(ln_w, wi, wo, a_down, a_up)

    def run(single_buffer):
        o = t5_adapter_layer_ff(hidden, params["wi"], params["wo"],
                                params["a_down"], params["a_up"],
                                tile_t=8,   # 2 grid steps at this toy size
                                single_buffer_weights=single_buffer)
        return jax.block_until_ready(o)

    try:
        out = run(True)
    except Exception:
        # This jax build rejected pipeline_mode=pl.Buffered(1); rerun with the
        # default double-buffered weights (correctness identical).
        out = run(False)

    ref = _reference(hidden, ln_w, wi, wo, a_down, a_up)
    # Looser tolerance: matmuls use bf16 operands (f32 MXU accumulation) and the
    # LN scale is folded into the bf16 wi; LayerNorm + residual adds are f32.
    assert jnp.allclose(out, ref, atol=2e-2, rtol=2e-2), "mismatch vs reference"

    # TODO(synk): dropout layers are treated as identity (eval mode); training-mode
    # stochastic dropout would need pltpu.prng_* inside the kernel.
    print("KERNEL_OK")
</pallas_src>

<mosaic_0001>
module attributes {stable_mosaic.version = 11 : i64} {
  func.func @_t5_adapter_ff_kernel(%arg0: i32, %arg1: memref<8x32xf32, #tpu.memory_space<vmem>>, %arg2: memref<32x64xbf16, #tpu.memory_space<vmem>>, %arg3: memref<64x32xbf16, #tpu.memory_space<vmem>>, %arg4: memref<32x128xbf16, #tpu.memory_space<vmem>>, %arg5: memref<128x32xbf16, #tpu.memory_space<vmem>>, %arg6: memref<8x32xf32, #tpu.memory_space<vmem>>) attributes {dimension_semantics = [#tpu.dimension_semantics<parallel>], iteration_bounds = array<i64: 2>, scalar_prefetch = 0 : i64, scratch_operands = 0 : i64, tpu.core_type = #tpu.core_type<tc>, window_params = [{transform_indices = @transform_0, window_bounds = array<i64: 8, 32>}, {pipeline_mode = #tpu.pipeline_mode<synchronous>, transform_indices = @transform_1, window_bounds = array<i64: 32, 64>}, {pipeline_mode = #tpu.pipeline_mode<synchronous>, transform_indices = @transform_2, window_bounds = array<i64: 64, 32>}, {pipeline_mode = #tpu.pipeline_mode<synchronous>, transform_indices = @transform_3, window_bounds = array<i64: 32, 128>}, {pipeline_mode = #tpu.pipeline_mode<synchronous>, transform_indices = @transform_4, window_bounds = array<i64: 128, 32>}, {transform_indices = @transform_5, window_bounds = array<i64: 8, 32>}]} {
    %c0 = arith.constant 0 : index
    %c0_0 = arith.constant 0 : index
    %0 = vector.load %arg1[%c0, %c0_0] : memref<8x32xf32, #tpu.memory_space<vmem>>, vector<8x32xf32>
    %1 = arith.mulf %0, %0 : vector<8x32xf32>
    %cst = arith.constant dense<0.000000e+00> : vector<8xf32>
    %2 = vector.multi_reduction <add>, %1, %cst [1] : vector<8x32xf32> to vector<8xf32>
    %3 = vector.shape_cast %2 : vector<8xf32> to vector<8x1xf32>
    %cst_1 = arith.constant 3.200000e+01 : f32
    %4 = vector.broadcast %cst_1 : f32 to vector<8x1xf32>
    %5 = arith.divf %3, %4 : vector<8x1xf32>
    %cst_2 = arith.constant 9.99999997E-7 : f32
    %6 = vector.broadcast %cst_2 : f32 to vector<8x1xf32>
    %7 = arith.addf %5, %6 : vector<8x1xf32>
    %8 = math.rsqrt %7 : vector<8x1xf32>
    %9 = vector.broadcast %8 : vector<8x1xf32> to vector<8x32xf32>
    %10 = arith.mulf %0, %9 : vector<8x32xf32>
    %11 = arith.truncf %10 : vector<8x32xf32> to vector<8x32xbf16>
    %c0_3 = arith.constant 0 : index
    %c0_4 = arith.constant 0 : index
    %12 = vector.load %arg2[%c0_3, %c0_4] : memref<32x64xbf16, #tpu.memory_space<vmem>>, vector<32x64xbf16>
    %cst_5 = arith.constant dense<0.000000e+00> : vector<8x64xf32>
    %13 = tpu.matmul %11, %12, %cst_5 {dimension_numbers = #tpu.dot_dimension_numbers<[1], [0], [0], [1], [0, 0, 1, 1], [], []>} : vector<8x32xbf16>, vector<32x64xbf16>, vector<8x64xf32> -> vector<8x64xf32>
    %cst_6 = arith.constant 0.000000e+00 : f32
    %14 = vector.broadcast %cst_6 : f32 to vector<8x64xf32>
    %15 = arith.maximumf %13, %14 : vector<8x64xf32>
    %16 = arith.truncf %15 : vector<8x64xf32> to vector<8x64xbf16>
    %c0_7 = arith.constant 0 : index
    %c0_8 = arith.constant 0 : index
    %17 = vector.load %arg3[%c0_7, %c0_8] : memref<64x32xbf16, #tpu.memory_space<vmem>>, vector<64x32xbf16>
    %cst_9 = arith.constant dense<0.000000e+00> : vector<8x32xf32>
    %18 = tpu.matmul %16, %17, %cst_9 {dimension_numbers = #tpu.dot_dimension_numbers<[1], [0], [0], [1], [0, 0, 1, 1], [], []>} : vector<8x64xbf16>, vector<64x32xbf16>, vector<8x32xf32> -> vector<8x32xf32>
    %19 = arith.truncf %18 : vector<8x32xf32> to vector<8x32xbf16>
    %c0_10 = arith.constant 0 : index
    %c0_11 = arith.constant 0 : index
    %20 = vector.load %arg4[%c0_10, %c0_11] : memref<32x128xbf16, #tpu.memory_space<vmem>>, vector<32x128xbf16>
    %cst_12 = arith.constant dense<0.000000e+00> : vector<8x128xf32>
    %21 = tpu.matmul %19, %20, %cst_12 {dimension_numbers = #tpu.dot_dimension_numbers<[1], [0], [0], [1], [0, 0, 1, 1], [], []>} : vector<8x32xbf16>, vector<32x128xbf16>, vector<8x128xf32> -> vector<8x128xf32>
    %cst_13 = arith.constant 0.000000e+00 : f32
    %22 = vector.broadcast %cst_13 : f32 to vector<8x128xf32>
    %23 = arith.maximumf %21, %22 : vector<8x128xf32>
    %24 = arith.truncf %23 : vector<8x128xf32> to vector<8x128xbf16>
    %c0_14 = arith.constant 0 : index
    %c0_15 = arith.constant 0 : index
    %25 = vector.load %arg5[%c0_14, %c0_15] : memref<128x32xbf16, #tpu.memory_space<vmem>>, vector<128x32xbf16>
    %cst_16 = arith.constant dense<0.000000e+00> : vector<8x32xf32>
    %26 = tpu.matmul %24, %25, %cst_16 {dimension_numbers = #tpu.dot_dimension_numbers<[1], [0], [0], [1], [0, 0, 1, 1], [], []>} : vector<8x128xbf16>, vector<128x32xbf16>, vector<8x32xf32> -> vector<8x32xf32>
    %27 = arith.addf %26, %18 : vector<8x32xf32>
    %28 = arith.addf %27, %0 : vector<8x32xf32>
    %c0_17 = arith.constant 0 : index
    %c0_18 = arith.constant 0 : index
    %29 = vector.load %arg6[%c0_17, %c0_18] : memref<8x32xf32, #tpu.memory_space<vmem>>, vector<8x32xf32>
    tpu.vector_store %arg6[%c0_17, %c0_18], %28 {strides = array<i32>} : memref<8x32xf32, #tpu.memory_space<vmem>>, vector<8x32xf32>,
    return
  }
  func.func @transform_0(%arg0: i32) -> (i32, i32) {
    %c0_i32 = arith.constant 0 : i32
    %c0_i32_0 = arith.constant 0 : i32
    return %arg0, %c0_i32 : i32, i32
  }
  func.func @transform_1(%arg0: i32) -> (i32, i32) {
    %c0_i32 = arith.constant 0 : i32
    %c0_i32_0 = arith.constant 0 : i32
    %c0_i32_1 = arith.constant 0 : i32
    return %c0_i32, %c0_i32_0 : i32, i32
  }
  func.func @transform_2(%arg0: i32) -> (i32, i32) {
    %c0_i32 = arith.constant 0 : i32
    %c0_i32_0 = arith.constant 0 : i32
    %c0_i32_1 = arith.constant 0 : i32
    return %c0_i32, %c0_i32_0 : i32, i32
  }
  func.func @transform_3(%arg0: i32) -> (i32, i32) {
    %c0_i32 = arith.constant 0 : i32
    %c0_i32_0 = arith.constant 0 : i32
    %c0_i32_1 = arith.constant 0 : i32
    return %c0_i32, %c0_i32_0 : i32, i32
  }
  func.func @transform_4(%arg0: i32) -> (i32, i32) {
    %c0_i32 = arith.constant 0 : i32
    %c0_i32_0 = arith.constant 0 : i32
    %c0_i32_1 = arith.constant 0 : i32
    return %c0_i32, %c0_i32_0 : i32, i32
  }
  func.func @transform_5(%arg0: i32) -> (i32, i32) {
    %c0_i32 = arith.constant 0 : i32
    %c0_i32_0 = arith.constant 0 : i32
    return %arg0, %c0_i32 : i32, i32
  }
}

module attributes {stable_mosaic.version = 11 : i64} {
  func.func @_t5_adapter_ff_kernel(%arg0: i32, %arg1: memref<8x32xf32, #tpu.memory_space<vmem>>, %arg2: memref<32x64xbf16, #tpu.memory_space<vmem>>, %arg3: memref<64x32xbf16, #tpu.memory_space<vmem>>, %arg4: memref<32x128xbf16, #tpu.memory_space<vmem>>, %arg5: memref<128x32xbf16, #tpu.memory_space<vmem>>, %arg6: memref<8x32xf32, #tpu.memory_space<vmem>>) attributes {dimension_semantics = [#tpu.dimension_semantics<parallel>], iteration_bounds = array<i64: 2>, scalar_prefetch = 0 : i64, scratch_operands = 0 : i64, tpu.core_type = #tpu.core_type<tc>, window_params = [{transform_indices = @transform_0, window_bounds = array<i64: 8, 32>}, {pipeline_mode = #tpu.pipeline_mode<synchronous>, transform_indices = @transform_1, window_bounds = array<i64: 32, 64>}, {pipeline_mode = #tpu.pipeline_mode<synchronous>, transform_indices = @transform_2, window_bounds = array<i64: 64, 32>}, {pipeline_mode = #tpu.pipeline_mode<synchronous>, transform_indices = @transform_3, window_bounds = array<i64: 32, 128>}, {pipeline_mode = #tpu.pipeline_mode<synchronous>, transform_indices = @transform_4, window_bounds = array<i64: 128, 32>}, {transform_indices = @transform_5, window_bounds = array<i64: 8, 32>}]} {
    %c0 = arith.constant 0 : index
    %c0_0 = arith.constant 0 : index
    %0 = vector.load %arg1[%c0, %c0_0] : memref<8x32xf32, #tpu.memory_space<vmem>>, vector<8x32xf32>
    %1 = arith.mulf %0, %0 : vector<8x32xf32>
    %cst = arith.constant dense<0.000000e+00> : vector<8xf32>
    %2 = vector.multi_reduction <add>, %1, %cst [1] : vector<8x32xf32> to vector<8xf32>
    %3 = vector.shape_cast %2 : vector<8xf32> to vector<8x1xf32>
    %cst_1 = arith.constant 3.200000e+01 : f32
    %4 = vector.broadcast %cst_1 : f32 to vector<8x1xf32>
    %5 = arith.divf %3, %4 : vector<8x1xf32>
    %cst_2 = arith.constant 9.99999997E-7 : f32
    %6 = vector.broadcast %cst_2 : f32 to vector<8x1xf32>
    %7 = arith.addf %5, %6 : vector<8x1xf32>
    %8 = math.rsqrt %7 : vector<8x1xf32>
    %9 = vector.broadcast %8 : vector<8x1xf32> to vector<8x32xf32>
    %10 = arith.mulf %0, %9 : vector<8x32xf32>
    %11 = arith.truncf %10 : vector<8x32xf32> to vector<8x32xbf16>
    %c0_3 = arith.constant 0 : index
    %c0_4 = arith.constant 0 : index
    %12 = vector.load %arg2[%c0_3, %c0_4] : memref<32x64xbf16, #tpu.memory_space<vmem>>, vector<32x64xbf16>
    %cst_5 = arith.constant dense<0.000000e+00> : vector<8x64xf32>
    %13 = tpu.matmul %11, %12, %cst_5 {dimension_numbers = #tpu.dot_dimension_numbers<[1], [0], [0], [1], [0, 0, 1, 1], [], []>} : vector<8x32xbf16>, vector<32x64xbf16>, vector<8x64xf32> -> vector<8x64xf32>
    %cst_6 = arith.constant 0.000000e+00 : f32
    %14 = vector.broadcast %cst_6 : f32 to vector<8x64xf32>
    %15 = arith.maximumf %13, %14 : vector<8x64xf32>
    %16 = arith.truncf %15 : vector<8x64xf32> to vector<8x64xbf16>
    %c0_7 = arith.constant 0 : index
    %c0_8 = arith.constant 0 : index
    %17 = vector.load %arg3[%c0_7, %c0_8] : memref<64x32xbf16, #tpu.memory_space<vmem>>, vector<64x32xbf16>
    %cst_9 = arith.constant dense<0.000000e+00> : vector<8x32xf32>
    %18 = tpu.matmul %16, %17, %cst_9 {dimension_numbers = #tpu.dot_dimension_numbers<[1], [0], [0], [1], [0, 0, 1, 1], [], []>} : vector<8x64xbf16>, vector<64x32xbf16>, vector<8x32xf32> -> vector<8x32xf32>
    %19 = arith.truncf %18 : vector<8x32xf32> to vector<8x32xbf16>
    %c0_10 = arith.constant 0 : index
    %c0_11 = arith.constant 0 : index
    %20 = vector.load %arg4[%c0_10, %c0_11] : memref<32x128xbf16, #tpu.memory_space<vmem>>, vector<32x128xbf16>
    %cst_12 = arith.constant dense<0.000000e+00> : vector<8x128xf32>
    %21 = tpu.matmul %19, %20, %cst_12 {dimension_numbers = #tpu.dot_dimension_numbers<[1], [0], [0], [1], [0, 0, 1, 1], [], []>} : vector<8x32xbf16>, vector<32x128xbf16>, vector<8x128xf32> -> vector<8x128xf32>
    %cst_13 = arith.constant 0.000000e+00 : f32
    %22 = vector.broadcast %cst_13 : f32 to vector<8x128xf32>
    %23 = arith.maximumf %21, %22 : vector<8x128xf32>
    %24 = arith.truncf %23 : vector<8x128xf32> to vector<8x128xbf16>
    %c0_14 = arith.constant 0 : index
    %c0_15 = arith.constant 0 : index
    %25 = vector.load %arg5[%c0_14, %c0_15] : memref<128x32xbf16, #tpu.memory_space<vmem>>, vector<128x32xbf16>
    %cst_16 = arith.constant dense<0.000000e+00> : vector<8x32xf32>
    %26 = tpu.matmul %24, %25, %cst_16 {dimension_numbers = #tpu.dot_dimension_numbers<[1], [0], [0], [1], [0, 0, 1, 1], [], []>} : vector<8x128xbf16>, vector<128x32xbf16>, vector<8x32xf32> -> vector<8x32xf32>
    %27 = arith.addf %26, %18 : vector<8x32xf32>
    %28 = arith.addf %27, %0 : vector<8x32xf32>
    %c0_17 = arith.constant 0 : index
    %c0_18 = arith.constant 0 : index
    %29 = vector.load %arg6[%c0_17, %c0_18] : memref<8x32xf32, #tpu.memory_space<vmem>>, vector<8x32xf32>
    tpu.vector_store %arg6[%c0_17, %c0_18], %28 {strides = array<i32>} : memref<8x32xf32, #tpu.memory_space<vmem>>, vector<8x32xf32>,
    return
  }
  func.func @transform_0(%arg0: i32) -> (i32, i32) {
    %c0_i32 = arith.constant 0 : i32
    %c0_i32_0 = arith.constant 0 : i32
    return %arg0, %c0_i32 : i32, i32
  }
  func.func @transform_1(%arg0: i32) -> (i32, i32) {
    %c0_i32 = arith.constant 0 : i32
    %c0_i32_0 = arith.constant 0 : i32
    %c0_i32_1 = arith.constant 0 : i32
    return %c0_i32, %c0_i32_0 : i32, i32
  }
  func.func @transform_2(%arg0: i32) -> (i32, i32) {
    %c0_i32 = arith.constant 0 : i32
    %c0_i32_0 = arith.constant 0 : i32
    %c0_i32_1 = arith.constant 0 : i32
    return %c0_i32, %c0_i32_0 : i32, i32
  }
  func.func @transform_3(%arg0: i32) -> (i32, i32) {
    %c0_i32 = arith.constant 0 : i32
    %c0_i32_0 = arith.constant 0 : i32
    %c0_i32_1 = arith.constant 0 : i32
    return %c0_i32, %c0_i32_0 : i32, i32
  }
  func.func @transform_4(%arg0: i32) -> (i32, i32) {
    %c0_i32 = arith.constant 0 : i32
    %c0_i32_0 = arith.constant 0 : i32
    %c0_i32_1 = arith.constant 0 : i32
    return %c0_i32, %c0_i32_0 : i32, i32
  }
  func.func @transform_5(%arg0: i32) -> (i32, i32) {
    %c0_i32 = arith.constant 0 : i32
    %c0_i32_0 = arith.constant 0 : i32
    return %arg0, %c0_i32 : i32, i32
  }
}

</mosaic_0001>

<llo_original>
// kernel: t5_adapter_layer_ff.1
$region0: #{t5_adapter_layer_ff.1}
  #allocation0 [shape = 'u32[]', space=smem, size = 0x4, offset = 0x4, fixed_abs, tag = 'smem constant byte address 0x4 - core index']
  #allocation1 [shape = 'u32[72,128]{1,0:T(1,128)}', space=vmem, size = 0x9000, scoped, tag = 'internal scratch']
  %s0 = inlined_call_operand.vmem [shape: f32[16,32], index: 0, kind: input, shape index: {}]
  %s1 = inlined_call_operand.vmem [shape: bf16[32,64], index: 1, kind: input, shape index: {}]
  %s2 = inlined_call_operand.vmem [shape: bf16[64,32], index: 2, kind: input, shape index: {}]
  %s3 = inlined_call_operand.vmem [shape: bf16[32,128], index: 3, kind: input, shape index: {}]
  %s4 = inlined_call_operand.vmem [shape: bf16[128,32], index: 4, kind: input, shape index: {}]
  %s5 = inlined_call_operand.hbm [shape: f32[16,32], index: 5, kind: output, shape index: {}]
  %s6 = sld [smem:[#allocation0]]
  $region53: #{t5_adapter_layer_ff.1} parent=0
    _
  %s8 = ssub.s32 1, %s6
  %s9 = scalar_select 0, %s8, %s6
  $region1: #{t5_adapter_layer_ff.1} parent=0
    #allocation2 [shape = 'u8[8192]{0}', space=vmem, size = 0x2000, scoped, tag = 'output window, operand 0']
    #allocation3 [shape = 's32[2]{0}', space=sflag, size = 0x8, scoped, tag = 'scoped memory for t5_adapter_layer_ff.1']
    %10 = vsyncpa [#allocation3], 0
    %s11 = scalar_lea.sflag [#allocation3], 1
    %12 = vsyncpa %s11, 0
    loop: start=0, step=1, limit=4
    $region2: #{t5_adapter_layer_ff.1} parent=1 // loop_pre_header
      _
    $region3: #{t5_adapter_layer_ff.1} parent=1 // loop_header
      %s14 = sphi 0, %s18
      %p15 = scmp.ge.s32.totalorder %s14, 4
      %s24 = sphi 0, %s26
      %s27 = sphi 0, %s24
      %s28 = sphi 0, %s27
      %s44 = sphi 0, %s28
      %s48 = sphi 0, %s48
      %s50 = sphi 0, %s48
      %s51 = sphi 0, %s50
      %s65 = sphi 0, %s51
      %s69 = sphi 0, %s69
      %s71 = sphi 0, %s69
      %s72 = sphi 0, %s71
      %s86 = sphi 0, %s72
      %s90 = sphi 0, %s90
      %s92 = sphi 0, %s90
      %s93 = sphi 0, %s92
      %s107 = sphi 0, %s93
      %s111 = sphi 0, %s111
      %s113 = sphi 0, %s111
      %s114 = sphi 0, %s113
      %s128 = sphi 0, %s114
      %s134 = sphi 0, %s136
      %s137 = sphi 0, %s134
      %s138 = sphi 0, %s137
      %s154 = sphi 0, %s138
    $region4: #{t5_adapter_layer_ff.1} parent=1 // loop_header_branch
      %17 = sbr.rel (%p15) target = $region8
    $region5: #{t5_adapter_layer_ff.1} parent=1 // loop_body
      %s19 = ssub.s32 %s14, 1
      %s20 = ssub.s32 %s14, 2
      %s21 = sadd.s32 %s14, 1
      %s22 = ssub.s32 %s14, %s21
      %p23 = scmp.eq.s32.totalorder %s22, 0
      %s25 = sadd.s32 %s24, 1
      %s26 = scalar_select %p23, %s24, %s25
      %p29 = pneg %p23
      %p30 = scmp.eq.s32.totalorder %s14, 1
      %p31 = por %p29, %p30
      %p32 = scmp.ne.s32.totalorder %s24, %s27
      %p33 = scmp.eq.s32.totalorder %s14, 0
      %p34 = por %p32, %p33
      %p35 = scmp.ne.s32.totalorder %s24, %s27
      %p36 = scmp.eq.s32.totalorder %s19, 1
      %p37 = por %p35, %p36
      %p38 = scmp.ne.s32.totalorder %s27, %s28
      %p39 = scmp.eq.s32.totalorder %s19, 0
      %p40 = por %p38, %p39
      %p41 = scmp.ne.s32.totalorder %s27, %s28
      %p42 = scmp.eq.s32.totalorder %s20, 1
      %p43 = por %p41, %p42
      %p45 = scmp.ne.s32.totalorder %s28, %s44
      %p46 = scmp.eq.s32.totalorder %s20, 0
      %p47 = por %p45, %p46
      %s49 = sadd.s32 %s48, 1
      %p52 = scmp.eq.s32.totalorder %s14, 1
      %p53 = scmp.ne.s32.totalorder %s48, %s50
      %p54 = scmp.eq.s32.totalorder %s14, 0
      %p55 = por %p53, %p54
      %p56 = scmp.ne.s32.totalorder %s48, %s50
      %p57 = scmp.eq.s32.totalorder %s19, 1
      %p58 = por %p56, %p57
      %p59 = scmp.ne.s32.totalorder %s50, %s51
      %p60 = scmp.eq.s32.totalorder %s19, 0
      %p61 = por %p59, %p60
      %p62 = scmp.ne.s32.totalorder %s50, %s51
      %p63 = scmp.eq.s32.totalorder %s20, 1
      %p64 = por %p62, %p63
      %p66 = scmp.ne.s32.totalorder %s51, %s65
      %p67 = scmp.eq.s32.totalorder %s20, 0
      %p68 = por %p66, %p67
      %s70 = sadd.s32 %s69, 1
      %p73 = scmp.eq.s32.totalorder %s14, 1
      %p74 = scmp.ne.s32.totalorder %s69, %s71
      %p75 = scmp.eq.s32.totalorder %s14, 0
      %p76 = por %p74, %p75
      %p77 = scmp.ne.s32.totalorder %s69, %s71
      %p78 = scmp.eq.s32.totalorder %s19, 1
      %p79 = por %p77, %p78
      %p80 = scmp.ne.s32.totalorder %s71, %s72
      %p81 = scmp.eq.s32.totalorder %s19, 0
      %p82 = por %p80, %p81
      %p83 = scmp.ne.s32.totalorder %s71, %s72
      %p84 = scmp.eq.s32.totalorder %s20, 1
      %p85 = por %p83, %p84
      %p87 = scmp.ne.s32.totalorder %s72, %s86
      %p88 = scmp.eq.s32.totalorder %s20, 0
      %p89 = por %p87, %p88
      %s91 = sadd.s32 %s90, 1
      %p94 = scmp.eq.s32.totalorder %s14, 1
      %p95 = scmp.ne.s32.totalorder %s90, %s92
      %p96 = scmp.eq.s32.totalorder %s14, 0
      %p97 = por %p95, %p96
      %p98 = scmp.ne.s32.totalorder %s90, %s92
      %p99 = scmp.eq.s32.totalorder %s19, 1
      %p100 = por %p98, %p99
      %p101 = scmp.ne.s32.totalorder %s92, %s93
      %p102 = scmp.eq.s32.totalorder %s19, 0
      %p103 = por %p101, %p102
      %p104 = scmp.ne.s32.totalorder %s92, %s93
      %p105 = scmp.eq.s32.totalorder %s20, 1
      %p106 = por %p104, %p105
      %p108 = scmp.ne.s32.totalorder %s93, %s107
      %p109 = scmp.eq.s32.totalorder %s20, 0
      %p110 = por %p108, %p109
      %s112 = sadd.s32 %s111, 1
      %p115 = scmp.eq.s32.totalorder %s14, 1
      %p116 = scmp.ne.s32.totalorder %s111, %s113
      %p117 = scmp.eq.s32.totalorder %s14, 0
      %p118 = por %p116, %p117
      %p119 = scmp.ne.s32.totalorder %s111, %s113
      %p120 = scmp.eq.s32.totalorder %s19, 1
      %p121 = por %p119, %p120
      %p122 = scmp.ne.s32.totalorder %s113, %s114
      %p123 = scmp.eq.s32.totalorder %s19, 0
      %p124 = por %p122, %p123
      %p125 = scmp.ne.s32.totalorder %s113, %s114
      %p126 = scmp.eq.s32.totalorder %s20, 1
      %p127 = por %p125, %p126
      %p129 = scmp.ne.s32.totalorder %s114, %s128
      %p130 = scmp.eq.s32.totalorder %s20, 0
      %p131 = por %p129, %p130
      %s132 = ssub.s32 %s14, %s21
      %p133 = scmp.eq.s32.totalorder %s132, 0
      %s135 = sadd.s32 %s134, 1
      %s136 = scalar_select %p133, %s134, %s135
      %p139 = pneg %p133
      %p140 = scmp.eq.s32.totalorder %s14, 1
      %p141 = por %p139, %p140
      %p142 = scmp.ne.s32.totalorder %s134, %s137
      %p143 = scmp.eq.s32.totalorder %s14, 0
      %p144 = por %p142, %p143
      %p145 = scmp.ne.s32.totalorder %s134, %s137
      %p146 = scmp.eq.s32.totalorder %s19, 1
      %p147 = por %p145, %p146
      %p148 = scmp.ne.s32.totalorder %s137, %s138
      %p149 = scmp.eq.s32.totalorder %s19, 0
      %p150 = por %p148, %p149
      %p151 = scmp.ne.s32.totalorder %s137, %s138
      %p152 = scmp.eq.s32.totalorder %s20, 1
      %p153 = por %p151, %p152
      %p155 = scmp.ne.s32.totalorder %s138, %s154
      %p156 = scmp.eq.s32.totalorder %s20, 0
      %p157 = por %p155, %p156
      %p158 = scmp.le.s32.totalorder 1, %s14
      %p159 = scmp.lt.s32.totalorder %s14, 3
      %p160 = pnand %p158, %p159
      %p161 = pneg %p160
      // Predicated region
      $region9: #{t5_adapter_layer_ff.1} parent=5 // pred_check
        _
      $region10: #{t5_adapter_layer_ff.1} parent=5 // pred_check_branch
        %163 = sbr.rel (%p160) target = $region12
      $region11: #{t5_adapter_layer_ff.1} parent=5 // pred_region
        %s164 = ssub.s32 %s14, 1
        // Predicated region
        $region13: #{t5_adapter_layer_ff.1} parent=11 // pred_check
          %p165 = pneg %p61
        $region14: #{t5_adapter_layer_ff.1} parent=11 // pred_check_branch
          %167 = sbr.rel (%p165) target = $region16
        $region15: #{t5_adapter_layer_ff.1} parent=11 // pred_region
          _
        $region16: #{t5_adapter_layer_ff.1} parent=11 // pred_fallthru
          _
        // Predicated region
        $region17: #{t5_adapter_layer_ff.1} parent=11 // pred_check
          %p168 = pneg %p82
        $region18: #{t5_adapter_layer_ff.1} parent=11 // pred_check_branch
          %170 = sbr.rel (%p168) target = $region20
        $region19: #{t5_adapter_layer_ff.1} parent=11 // pred_region
          _
        $region20: #{t5_adapter_layer_ff.1} parent=11 // pred_fallthru
          _
        // Predicated region
        $region21: #{t5_adapter_layer_ff.1} parent=11 // pred_check
          %p171 = pneg %p103
        $region22: #{t5_adapter_layer_ff.1} parent=11 // pred_check_branch
          %173 = sbr.rel (%p171) target = $region24
        $region23: #{t5_adapter_layer_ff.1} parent=11 // pred_region
          _
        $region24: #{t5_adapter_layer_ff.1} parent=11 // pred_fallthru
          _
        // Predicated region
        $region25: #{t5_adapter_layer_ff.1} parent=11 // pred_check
          %p174 = pneg %p124
        $region26: #{t5_adapter_layer_ff.1} parent=11 // pred_check_branch
          %176 = sbr.rel (%p174) target = $region28
        $region27: #{t5_adapter_layer_ff.1} parent=11 // pred_region
          _
        $region28: #{t5_adapter_layer_ff.1} parent=11 // pred_fallthru
          _
      $region12: #{t5_adapter_layer_ff.1} parent=5 // pred_fallthru
        _
      %p177 = scmp.lt.s32.totalorder %s14, 2
      // Predicated region
      $region29: #{t5_adapter_layer_ff.1} parent=5 // pred_check
        %p178 = pneg %p177
      $region30: #{t5_adapter_layer_ff.1} parent=5 // pred_check_branch
        %180 = sbr.rel (%p178) target = $region32
      $region31: #{t5_adapter_layer_ff.1} parent=5 // pred_region
        // Predicated region
        $region33: #{t5_adapter_layer_ff.1} parent=31 // pred_check
          %p181 = pneg %p34
        $region34: #{t5_adapter_layer_ff.1} parent=31 // pred_check_branch
          %183 = sbr.rel (%p181) target = $region36
        $region35: #{t5_adapter_layer_ff.1} parent=31 // pred_region
          %p184 = scmp.lt.s32.totalorder %s14, 1
          %s185 = scalar_select %p184, %s14, 1
          %s186 = smul.addr %s185, 8
          %s187 = scalar_lea.vmem %s0, %s186
        $region36: #{t5_adapter_layer_ff.1} parent=31 // pred_fallthru
          _
      $region32: #{t5_adapter_layer_ff.1} parent=5 // pred_fallthru
        _
      %p188 = scmp.le.s32.totalorder 1, %s14
      %p189 = scmp.lt.s32.totalorder %s14, 3
      %p190 = pnand %p188, %p189
      %p191 = pneg %p190
      // Predicated region
      $region37: #{t5_adapter_layer_ff.1} parent=5 // pred_check
        _
      $region38: #{t5_adapter_layer_ff.1} parent=5 // pred_check_branch
        %193 = sbr.rel (%p190) target = $region40
      $region39: #{t5_adapter_layer_ff.1} parent=5 // pred_region
        %s194 = ssub.s32 %s14, 1
        %p195 = scmp.lt.s32.totalorder %s19, 1
        %s196 = scalar_select %p195, %s19, 1
        %s197 = smul.addr %s196, 8
        %s198 = scalar_lea.vmem %s0, %s197
        %p199 = pneg %p40
        %p200 = pneg %p37
        %p201 = pneg %p61
        %p202 = pneg %p58
        %p203 = pneg %p82
        %p204 = pneg %p79
        %p205 = pneg %p103
        %p206 = pneg %p100
        %p207 = pneg %p124
        %p208 = pneg %p121
        %p209 = pneg %p150
        %p210 = pneg %p147
        %s211 = sand.u32 %s137, 1
        %s212 = scalar_lea.sflag [#allocation3], %s211
        %s213 = sand.u32 %s137, 1
        %s214 = smul.addr %s213, 8
        %s215 = scalar_lea.vmem [#allocation2], %s214
        %p216 = scmp.lt.s32.totalorder %s19, 1
        %s217 = scalar_select %p216, %s19, 1
        %s218 = smul.addr %s217, 8
        %s219 = scalar_lea.vmem %s0, %s218
        %v221 = vld [vmem:[%s219] sm:$0xff]
        %v222 = vmul.f32 %v221, %v221
        %vm223 = vcmask 261120
        %v224 = vsel %vm223, %v222, 0.0
        %225 = vadd.xlane.f32.xlu0 %v224
        %v226 = vpop.xlane.xlu0 %225
        %v227 = vrcp.pop 32.0
        %v228 = vmul.f32 32.0, %v227
        %v229 = vsub.f32 1.0, %v228
        %v230 = vmul.f32 %v227, %v229
        %v231 = vadd.f32 %v227, %v230
        %vm232 = vweird.f32 %v227
        %v233 = vsel %vm232, %v227, %v231
        %v234 = vmul.f32 %v226, %v233
        %v235 = vadd.f32 %v234, 1e-06
        %v236 = vrsqrt.pop %v235
        %v237 = vmul.f32 %v236, %v235
        %v238 = vmul.f32 %v237, %v236
        %v239 = vmul.f32 0.5, %v238
        %v240 = vsub.f32 1.5, %v239
        %v241 = vmul.f32 %v236, %v240
        %vm242 = vweird.f32 %v235
        %vm243 = vweird.f32 %v236
        %vm244 = vmor %vm242, %vm243
        %v245 = vsel %vm244, %v236, %v241
        %v246 = vmul.f32 %v221, %v245
        %v247 = vpack.c.bf16 %v246, %v246
        %v248 = vld [vmem:[%s1] sm:$0xf]
        %v249 = vld [vmem:[%s1 + $0x4] sm:$0xf]
        %v250 = vld [vmem:[%s1 + $0x8] sm:$0xf]
        %v251 = vld [vmem:[%s1 + $0xc] sm:$0xf]
        %v256 = vunpack.c.l.b16 %v248
        %v257 = vunpack.c.l.b16 %v249
        %v258 = vunpack.c.l.b16 %v250
        %v259 = vunpack.c.l.b16 %v251
        %v260 = vpack.c.b16 %v257, %v256
        %v261 = vpack.c.b16 %v259, %v258
        %v265 = vsel %vm223, %v247, 0
        %267 = vmatpush.bf16.msra.mxu0 0
        %268 = vmatpush.bf16.msra.mxu0 0
        %269 = vmatpush.bf16.msra.mxu0 0
        %270 = vmatpush.bf16.msra.mxu0 0
        %271 = vmatpush.bf16.msra.mxu0 0
        %272 = vmatpush.bf16.msra.mxu0 0
        %273 = vmatpush.bf16.msra.mxu0 %v261
        %274 = vmatpush.bf16.msra.mxu0 %v260
        %275 = vmatmul.bf16.gmra.mxu0 %v265
        %v276 = vpop.f32.mrf.mxu0
        %v277 = vadd.f32 0.0, %v276
        %v278 = vpop.f32.mrf.mxu0
        %279 = vdwg.mxu0
        %v280 = vmax.f32 %v277, 0.0
        %v281 = vpack.c.bf16 %v280, %v280
        %v282 = vld [vmem:[%s2] sm:$0xf]
        %v283 = vld [vmem:[%s2 + $0x4] sm:$0xf]
        %v284 = vld [vmem:[%s2 + $0x8] sm:$0xf]
        %v285 = vld [vmem:[%s2 + $0xc] sm:$0xf]
        %v286 = vld [vmem:[%s2 + $0x10] sm:$0xf]
        %v287 = vld [vmem:[%s2 + $0x14] sm:$0xf]
        %v288 = vld [vmem:[%s2 + $0x18] sm:$0xf]
        %v289 = vld [vmem:[%s2 + $0x1c] sm:$0xf]
        %v298 = vunpack.c.l.b16 %v282
        %v299 = vunpack.c.l.b16 %v283
        %v300 = vunpack.c.l.b16 %v284
        %v301 = vunpack.c.l.b16 %v285
        %v302 = vunpack.c.l.b16 %v286
        %v303 = vunpack.c.l.b16 %v287
        %v304 = vunpack.c.l.b16 %v288
        %v305 = vunpack.c.l.b16 %v289
        %v306 = vpack.c.b16 %v299, %v298
        %v307 = vpack.c.b16 %v301, %v300
        %v308 = vpack.c.b16 %v303, %v302
        %v309 = vpack.c.b16 %v305, %v304
        %vm314 = vcmask 523264
        %v316 = vsel %vm314, %v281, 0
        %318 = vmatpush.bf16.msra.mxu0 0
        %319 = vmatpush.bf16.msra.mxu0 0
        %320 = vmatpush.bf16.msra.mxu0 0
        %321 = vmatpush.bf16.msra.mxu0 0
        %322 = vmatpush.bf16.msra.mxu0 %v309
        %323 = vmatpush.bf16.msra.mxu0 %v308
        %324 = vmatpush.bf16.msra.mxu0 %v307
        %325 = vmatpush.bf16.msra.mxu0 %v306
        %326 = vmatmul.bf16.gmra.mxu0 %v316
        %v327 = vpop.f32.mrf.mxu0
        %v328 = vadd.f32 0.0, %v327
        %v329 = vpop.f32.mrf.mxu0
        %330 = vdwg.mxu0
        %v331 = vpack.c.bf16 %v328, %v328
        %v332 = vld [vmem:[%s3] sm:$0xf]
        %v333 = vld [vmem:[%s3 + $0x4] sm:$0xf]
        %v334 = vld [vmem:[%s3 + $0x8] sm:$0xf]
        %v335 = vld [vmem:[%s3 + $0xc] sm:$0xf]
        %v340 = vunpack.c.l.b16 %v332
        %v341 = vunpack.c.l.b16 %v333
        %v342 = vunpack.c.l.b16 %v334
        %v343 = vunpack.c.l.b16 %v335
        %v344 = vpack.c.b16 %v341, %v340
        %v345 = vpack.c.b16 %v343, %v342
        %v349 = vsel %vm223, %v331, 0
        %351 = vmatpush.bf16.msra.mxu0 0
        %352 = vmatpush.bf16.msra.mxu0 0
        %353 = vmatpush.bf16.msra.mxu0 0
        %354 = vmatpush.bf16.msra.mxu0 0
        %355 = vmatpush.bf16.msra.mxu0 0
        %356 = vmatpush.bf16.msra.mxu0 0
        %357 = vmatpush.bf16.msra.mxu0 %v345
        %358 = vmatpush.bf16.msra.mxu0 %v344
        %359 = vmatmul.bf16.gmra.mxu0 %v349
        %v360 = vpop.f32.mrf.mxu0
        %v361 = vadd.f32 0.0, %v360
        %v362 = vpop.f32.mrf.mxu0
        %363 = vdwg.mxu0
        %v364 = vmax.f32 %v361, 0.0
        %v365 = vpack.c.bf16 %v364, %v364
        %v366 = vld [vmem:[%s4] sm:$0xf]
        %v367 = vld [vmem:[%s4 + $0x4] sm:$0xf]
        %v368 = vld [vmem:[%s4 + $0x8] sm:$0xf]
        %v369 = vld [vmem:[%s4 + $0xc] sm:$0xf]
        %v370 = vld [vmem:[%s4 + $0x10] sm:$0xf]
        %v371 = vld [vmem:[%s4 + $0x14] sm:$0xf]
        %v372 = vld [vmem:[%s4 + $0x18] sm:$0xf]
        %v373 = vld [vmem:[%s4 + $0x1c] sm:$0xf]
        %v374 = vld [vmem:[%s4 + $0x20] sm:$0xf]
        %v375 = vld [vmem:[%s4 + $0x24] sm:$0xf]
        %v376 = vld [vmem:[%s4 + $0x28] sm:$0xf]
        %v377 = vld [vmem:[%s4 + $0x2c] sm:$0xf]
        %v378 = vld [vmem:[%s4 + $0x30] sm:$0xf]
        %v379 = vld [vmem:[%s4 + $0x34] sm:$0xf]
        %v380 = vld [vmem:[%s4 + $0x38] sm:$0xf]
        %v381 = vld [vmem:[%s4 + $0x3c] sm:$0xf]
        %v398 = vunpack.c.l.b16 %v366
        %v399 = vunpack.c.l.b16 %v367
        %v400 = vunpack.c.l.b16 %v368
        %v401 = vunpack.c.l.b16 %v369
        %v402 = vunpack.c.l.b16 %v370
        %v403 = vunpack.c.l.b16 %v371
        %v404 = vunpack.c.l.b16 %v372
        %v405 = vunpack.c.l.b16 %v373
        %v406 = vunpack.c.l.b16 %v374
        %v407 = vunpack.c.l.b16 %v375
        %v408 = vunpack.c.l.b16 %v376
        %v409 = vunpack.c.l.b16 %v377
        %v410 = vunpack.c.l.b16 %v378
        %v411 = vunpack.c.l.b16 %v379
        %v412 = vunpack.c.l.b16 %v380
        %v413 = vunpack.c.l.b16 %v381
        %v414 = vpack.c.b16 %v399, %v398
        %v415 = vpack.c.b16 %v401, %v400
        %v416 = vpack.c.b16 %v403, %v402
        %v417 = vpack.c.b16 %v405, %v404
        %v418 = vpack.c.b16 %v407, %v406
        %v419 = vpack.c.b16 %v409, %v408
        %v420 = vpack.c.b16 %v411, %v410
        %v421 = vpack.c.b16 %v413, %v412
        %430 = vmatpush.bf16.msra.mxu0 %v421
        %431 = vmatpush.bf16.msra.mxu0 %v420
        %432 = vmatpush.bf16.msra.mxu0 %v419
        %433 = vmatpush.bf16.msra.mxu0 %v418
        %434 = vmatpush.bf16.msra.mxu0 %v417
        %435 = vmatpush.bf16.msra.mxu0 %v416
        %436 = vmatpush.bf16.msra.mxu0 %v415
        %437 = vmatpush.bf16.msra.mxu0 %v414
        %438 = vmatmul.bf16.gmra.mxu0 %v365
        %v439 = vpop.f32.mrf.mxu0
        %v440 = vadd.f32 %v328, %v439
        %v441 = vpop.f32.mrf.mxu0
        %442 = vdwg.mxu0
        %v443 = vadd.f32 %v440, %v221
        %444 = vst.msk [vmem:[%s215] sm:$0xff] %vm223, %v443
        %s445 = sand.u32 %s137, 1
        %s446 = scalar_lea.sflag [#allocation3], %s445
        %s447 = sand.u32 %s137, 1
        %s448 = smul.addr %s447, 8
        %s449 = scalar_lea.vmem [#allocation2], %s448
        // Predicated region
        $region41: #{t5_adapter_layer_ff.1} parent=39 // pred_check
          %p450 = pneg %p147
        $region42: #{t5_adapter_layer_ff.1} parent=39 // pred_check_branch
          %452 = sbr.rel (%p450) target = $region44
        $region43: #{t5_adapter_layer_ff.1} parent=39 // pred_region
          %454 = vsyncadd %s446, 0
          %s455 = smul.addr %s19, 8
          %s456 = scalar_lea.hbm %s5, %s455
          %s458 = sshll.u32 %s449, 4
          %s459 = int_to_ptr.vmem [resolvable:$true] %s458
          %s460 = sshll.u32 %s456, 4
          %s461 = int_to_ptr.hbm [resolvable:$true] %s460
          %463 = dma.vmem_to_hbm [thread:$0]  %s459, 128, %s461, %s446
        $region44: #{t5_adapter_layer_ff.1} parent=39 // pred_fallthru
          _
      $region40: #{t5_adapter_layer_ff.1} parent=5 // pred_fallthru
        _
      %p464 = scmp.le.s32.totalorder 2, %s14
      // Predicated region
      $region45: #{t5_adapter_layer_ff.1} parent=5 // pred_check
        %p465 = pneg %p464
      $region46: #{t5_adapter_layer_ff.1} parent=5 // pred_check_branch
        %467 = sbr.rel (%p465) target = $region48
      $region47: #{t5_adapter_layer_ff.1} parent=5 // pred_region
        %s468 = ssub.s32 %s14, 2
        // Predicated region
        $region49: #{t5_adapter_layer_ff.1} parent=47 // pred_check
          %p469 = pneg %p153
        $region50: #{t5_adapter_layer_ff.1} parent=47 // pred_check_branch
          %471 = sbr.rel (%p469) target = $region52
        $region51: #{t5_adapter_layer_ff.1} parent=47 // pred_region
          %s472 = sand.u32 %s138, 1
          %s473 = scalar_lea.sflag [#allocation3], %s472
          %s474 = sand.u32 %s138, 1
          %s475 = smul.addr %s474, 8
          %s476 = scalar_lea.vmem [#allocation2], %s475
          %478 = dma.done %s473, 128
        $region52: #{t5_adapter_layer_ff.1} parent=47 // pred_fallthru
          _
      $region48: #{t5_adapter_layer_ff.1} parent=5 // pred_fallthru
        _
    $region6: #{t5_adapter_layer_ff.1} parent=1 // loop_footer
      %s18 = sadd.s32 1, %s14
    $region7: #{t5_adapter_layer_ff.1} parent=1 // loop_footer_branch
      %13 = sbr.rel target = $region3
    $region8: #{t5_adapter_layer_ff.1} parent=1 // loop_exit
      _
    %479 = vsyncpa [#allocation3], 1
    %s480 = scalar_lea.sflag [#allocation3], 1
    %481 = vsyncpa %s480, 1

// kernel: t5_adapter_layer_ff.1
$region0: #{t5_adapter_layer_ff.1}
  #allocation0 [shape = 'u32[]', space=smem, size = 0x4, offset = 0x4, fixed_abs, tag = 'smem constant byte address 0x4 - core index']
  #allocation1 [shape = 'u32[72,128]{1,0:T(1,128)}', space=vmem, size = 0x9000, scoped, tag = 'internal scratch']
  %s0 = inlined_call_operand.vmem [shape: f32[16,32], index: 0, kind: input, shape index: {}]
  %s1 = inlined_call_operand.vmem [shape: bf16[32,64], index: 1, kind: input, shape index: {}]
  %s2 = inlined_call_operand.vmem [shape: bf16[64,32], index: 2, kind: input, shape index: {}]
  %s3 = inlined_call_operand.vmem [shape: bf16[32,128], index: 3, kind: input, shape index: {}]
  %s4 = inlined_call_operand.vmem [shape: bf16[128,32], index: 4, kind: input, shape index: {}]
  %s5 = inlined_call_operand.hbm [shape: f32[16,32], index: 5, kind: output, shape index: {}]
  %s6 = sld [smem:[#allocation0]]
  $region53: #{t5_adapter_layer_ff.1} parent=0
    _
  %s8 = ssub.s32 1, %s6
  %s9 = scalar_select 0, %s8, %s6
  $region1: #{t5_adapter_layer_ff.1} parent=0
    #allocation2 [shape = 'u8[8192]{0}', space=vmem, size = 0x2000, scoped, tag = 'output window, operand 0']
    #allocation3 [shape = 's32[2]{0}', space=sflag, size = 0x8, scoped, tag = 'scoped memory for t5_adapter_layer_ff.1']
    %10 = vsyncpa [#allocation3], 0
    %s11 = scalar_lea.sflag [#allocation3], 1
    %12 = vsyncpa %s11, 0
    loop: start=0, step=1, limit=4
    $region2: #{t5_adapter_layer_ff.1} parent=1 // loop_pre_header
      _
    $region3: #{t5_adapter_layer_ff.1} parent=1 // loop_header
      %s14 = sphi 0, %s18
      %p15 = scmp.ge.s32.totalorder %s14, 4
      %s24 = sphi 0, %s26
      %s27 = sphi 0, %s24
      %s28 = sphi 0, %s27
      %s44 = sphi 0, %s28
      %s48 = sphi 0, %s48
      %s50 = sphi 0, %s48
      %s51 = sphi 0, %s50
      %s65 = sphi 0, %s51
      %s69 = sphi 0, %s69
      %s71 = sphi 0, %s69
      %s72 = sphi 0, %s71
      %s86 = sphi 0, %s72
      %s90 = sphi 0, %s90
      %s92 = sphi 0, %s90
      %s93 = sphi 0, %s92
      %s107 = sphi 0, %s93
      %s111 = sphi 0, %s111
      %s113 = sphi 0, %s111
      %s114 = sphi 0, %s113
      %s128 = sphi 0, %s114
      %s134 = sphi 0, %s136
      %s137 = sphi 0, %s134
      %s138 = sphi 0, %s137
      %s154 = sphi 0, %s138
    $region4: #{t5_adapter_layer_ff.1} parent=1 // loop_header_branch
      %17 = sbr.rel (%p15) target = $region8
    $region5: #{t5_adapter_layer_ff.1} parent=1 // loop_body
      %s19 = ssub.s32 %s14, 1
      %s20 = ssub.s32 %s14, 2
      %s21 = sadd.s32 %s14, 1
      %s22 = ssub.s32 %s14, %s21
      %p23 = scmp.eq.s32.totalorder %s22, 0
      %s25 = sadd.s32 %s24, 1
      %s26 = scalar_select %p23, %s24, %s25
      %p29 = pneg %p23
      %p30 = scmp.eq.s32.totalorder %s14, 1
      %p31 = por %p29, %p30
      %p32 = scmp.ne.s32.totalorder %s24, %s27
      %p33 = scmp.eq.s32.totalorder %s14, 0
      %p34 = por %p32, %p33
      %p35 = scmp.ne.s32.totalorder %s24, %s27
      %p36 = scmp.eq.s32.totalorder %s19, 1
      %p37 = por %p35, %p36
      %p38 = scmp.ne.s32.totalorder %s27, %s28
      %p39 = scmp.eq.s32.totalorder %s19, 0
      %p40 = por %p38, %p39
      %p41 = scmp.ne.s32.totalorder %s27, %s28
      %p42 = scmp.eq.s32.totalorder %s20, 1
      %p43 = por %p41, %p42
      %p45 = scmp.ne.s32.totalorder %s28, %s44
      %p46 = scmp.eq.s32.totalorder %s20, 0
      %p47 = por %p45, %p46
      %s49 = sadd.s32 %s48, 1
      %p52 = scmp.eq.s32.totalorder %s14, 1
      %p53 = scmp.ne.s32.totalorder %s48, %s50
      %p54 = scmp.eq.s32.totalorder %s14, 0
      %p55 = por %p53, %p54
      %p56 = scmp.ne.s32.totalorder %s48, %s50
      %p57 = scmp.eq.s32.totalorder %s19, 1
      %p58 = por %p56, %p57
      %p59 = scmp.ne.s32.totalorder %s50, %s51
      %p60 = scmp.eq.s32.totalorder %s19, 0
      %p61 = por %p59, %p60
      %p62 = scmp.ne.s32.totalorder %s50, %s51
      %p63 = scmp.eq.s32.totalorder %s20, 1
      %p64 = por %p62, %p63
      %p66 = scmp.ne.s32.totalorder %s51, %s65
      %p67 = scmp.eq.s32.totalorder %s20, 0
      %p68 = por %p66, %p67
      %s70 = sadd.s32 %s69, 1
      %p73 = scmp.eq.s32.totalorder %s14, 1
      %p74 = scmp.ne.s32.totalorder %s69, %s71
      %p75 = scmp.eq.s32.totalorder %s14, 0
      %p76 = por %p74, %p75
      %p77 = scmp.ne.s32.totalorder %s69, %s71
      %p78 = scmp.eq.s32.totalorder %s19, 1
      %p79 = por %p77, %p78
      %p80 = scmp.ne.s32.totalorder %s71, %s72
      %p81 = scmp.eq.s32.totalorder %s19, 0
      %p82 = por %p80, %p81
      %p83 = scmp.ne.s32.totalorder %s71, %s72
      %p84 = scmp.eq.s32.totalorder %s20, 1
      %p85 = por %p83, %p84
      %p87 = scmp.ne.s32.totalorder %s72, %s86
      %p88 = scmp.eq.s32.totalorder %s20, 0
      %p89 = por %p87, %p88
      %s91 = sadd.s32 %s90, 1
      %p94 = scmp.eq.s32.totalorder %s14, 1
      %p95 = scmp.ne.s32.totalorder %s90, %s92
      %p96 = scmp.eq.s32.totalorder %s14, 0
      %p97 = por %p95, %p96
      %p98 = scmp.ne.s32.totalorder %s90, %s92
      %p99 = scmp.eq.s32.totalorder %s19, 1
      %p100 = por %p98, %p99
      %p101 = scmp.ne.s32.totalorder %s92, %s93
      %p102 = scmp.eq.s32.totalorder %s19, 0
      %p103 = por %p101, %p102
      %p104 = scmp.ne.s32.totalorder %s92, %s93
      %p105 = scmp.eq.s32.totalorder %s20, 1
      %p106 = por %p104, %p105
      %p108 = scmp.ne.s32.totalorder %s93, %s107
      %p109 = scmp.eq.s32.totalorder %s20, 0
      %p110 = por %p108, %p109
      %s112 = sadd.s32 %s111, 1
      %p115 = scmp.eq.s32.totalorder %s14, 1
      %p116 = scmp.ne.s32.totalorder %s111, %s113
      %p117 = scmp.eq.s32.totalorder %s14, 0
      %p118 = por %p116, %p117
      %p119 = scmp.ne.s32.totalorder %s111, %s113
      %p120 = scmp.eq.s32.totalorder %s19, 1
      %p121 = por %p119, %p120
      %p122 = scmp.ne.s32.totalorder %s113, %s114
      %p123 = scmp.eq.s32.totalorder %s19, 0
      %p124 = por %p122, %p123
      %p125 = scmp.ne.s32.totalorder %s113, %s114
      %p126 = scmp.eq.s32.totalorder %s20, 1
      %p127 = por %p125, %p126
      %p129 = scmp.ne.s32.totalorder %s114, %s128
      %p130 = scmp.eq.s32.totalorder %s20, 0
      %p131 = por %p129, %p130
      %s132 = ssub.s32 %s14, %s21
      %p133 = scmp.eq.s32.totalorder %s132, 0
      %s135 = sadd.s32 %s134, 1
      %s136 = scalar_select %p133, %s134, %s135
      %p139 = pneg %p133
      %p140 = scmp.eq.s32.totalorder %s14, 1
      %p141 = por %p139, %p140
      %p142 = scmp.ne.s32.totalorder %s134, %s137
      %p143 = scmp.eq.s32.totalorder %s14, 0
      %p144 = por %p142, %p143
      %p145 = scmp.ne.s32.totalorder %s134, %s137
      %p146 = scmp.eq.s32.totalorder %s19, 1
      %p147 = por %p145, %p146
      %p148 = scmp.ne.s32.totalorder %s137, %s138
      %p149 = scmp.eq.s32.totalorder %s19, 0
      %p150 = por %p148, %p149
      %p151 = scmp.ne.s32.totalorder %s137, %s138
      %p152 = scmp.eq.s32.totalorder %s20, 1
      %p153 = por %p151, %p152
      %p155 = scmp.ne.s32.totalorder %s138, %s154
      %p156 = scmp.eq.s32.totalorder %s20, 0
      %p157 = por %p155, %p156
      %p158 = scmp.le.s32.totalorder 1, %s14
      %p159 = scmp.lt.s32.totalorder %s14, 3
      %p160 = pnand %p158, %p159
      %p161 = pneg %p160
      // Predicated region
      $region9: #{t5_adapter_layer_ff.1} parent=5 // pred_check
        _
      $region10: #{t5_adapter_layer_ff.1} parent=5 // pred_check_branch
        %163 = sbr.rel (%p160) target = $region12
      $region11: #{t5_adapter_layer_ff.1} parent=5 // pred_region
        %s164 = ssub.s32 %s14, 1
        // Predicated region
        $region13: #{t5_adapter_layer_ff.1} parent=11 // pred_check
          %p165 = pneg %p61
        $region14: #{t5_adapter_layer_ff.1} parent=11 // pred_check_branch
          %167 = sbr.rel (%p165) target = $region16
        $region15: #{t5_adapter_layer_ff.1} parent=11 // pred_region
          _
        $region16: #{t5_adapter_layer_ff.1} parent=11 // pred_fallthru
          _
        // Predicated region
        $region17: #{t5_adapter_layer_ff.1} parent=11 // pred_check
          %p168 = pneg %p82
        $region18: #{t5_adapter_layer_ff.1} parent=11 // pred_check_branch
          %170 = sbr.rel (%p168) target = $region20
        $region19: #{t5_adapter_layer_ff.1} parent=11 // pred_region
          _
        $region20: #{t5_adapter_layer_ff.1} parent=11 // pred_fallthru
          _
        // Predicated region
        $region21: #{t5_adapter_layer_ff.1} parent=11 // pred_check
          %p171 = pneg %p103
        $region22: #{t5_adapter_layer_ff.1} parent=11 // pred_check_branch
          %173 = sbr.rel (%p171) target = $region24
        $region23: #{t5_adapter_layer_ff.1} parent=11 // pred_region
          _
        $region24: #{t5_adapter_layer_ff.1} parent=11 // pred_fallthru
          _
        // Predicated region
        $region25: #{t5_adapter_layer_ff.1} parent=11 // pred_check
          %p174 = pneg %p124
        $region26: #{t5_adapter_layer_ff.1} parent=11 // pred_check_branch
          %176 = sbr.rel (%p174) target = $region28
        $region27: #{t5_adapter_layer_ff.1} parent=11 // pred_region
          _
        $region28: #{t5_adapter_layer_ff.1} parent=11 // pred_fallthru
          _
      $region12: #{t5_adapter_layer_ff.1} parent=5 // pred_fallthru
        _
      %p177 = scmp.lt.s32.totalorder %s14, 2
      // Predicated region
      $region29: #{t5_adapter_layer_ff.1} parent=5 // pred_check
        %p178 = pneg %p177
      $region30: #{t5_adapter_layer_ff.1} parent=5 // pred_check_branch
        %180 = sbr.rel (%p178) target = $region32
      $region31: #{t5_adapter_layer_ff.1} parent=5 // pred_region
        // Predicated region
        $region33: #{t5_adapter_layer_ff.1} parent=31 // pred_check
          %p181 = pneg %p34
        $region34: #{t5_adapter_layer_ff.1} parent=31 // pred_check_branch
          %183 = sbr.rel (%p181) target = $region36
        $region35: #{t5_adapter_layer_ff.1} parent=31 // pred_region
          %p184 = scmp.lt.s32.totalorder %s14, 1
          %s185 = scalar_select %p184, %s14, 1
          %s186 = smul.addr %s185, 8
          %s187 = scalar_lea.vmem %s0, %s186
        $region36: #{t5_adapter_layer_ff.1} parent=31 // pred_fallthru
          _
      $region32: #{t5_adapter_layer_ff.1} parent=5 // pred_fallthru
        _
      %p188 = scmp.le.s32.totalorder 1, %s14
      %p189 = scmp.lt.s32.totalorder %s14, 3
      %p190 = pnand %p188, %p189
      %p191 = pneg %p190
      // Predicated region
      $region37: #{t5_adapter_layer_ff.1} parent=5 // pred_check
        _
      $region38: #{t5_adapter_layer_ff.1} parent=5 // pred_check_branch
        %193 = sbr.rel (%p190) target = $region40
      $region39: #{t5_adapter_layer_ff.1} parent=5 // pred_region
        %s194 = ssub.s32 %s14, 1
        %p195 = scmp.lt.s32.totalorder %s19, 1
        %s196 = scalar_select %p195, %s19, 1
        %s197 = smul.addr %s196, 8
        %s198 = scalar_lea.vmem %s0, %s197
        %p199 = pneg %p40
        %p200 = pneg %p37
        %p201 = pneg %p61
        %p202 = pneg %p58
        %p203 = pneg %p82
        %p204 = pneg %p79
        %p205 = pneg %p103
        %p206 = pneg %p100
        %p207 = pneg %p124
        %p208 = pneg %p121
        %p209 = pneg %p150
        %p210 = pneg %p147
        %s211 = sand.u32 %s137, 1
        %s212 = scalar_lea.sflag [#allocation3], %s211
        %s213 = sand.u32 %s137, 1
        %s214 = smul.addr %s213, 8
        %s215 = scalar_lea.vmem [#allocation2], %s214
        %p216 = scmp.lt.s32.totalorder %s19, 1
        %s217 = scalar_select %p216, %s19, 1
        %s218 = smul.addr %s217, 8
        %s219 = scalar_lea.vmem %s0, %s218
        %v221 = vld [vmem:[%s219] sm:$0xff]
        %v222 = vmul.f32 %v221, %v221
        %vm223 = vcmask 261120
        %v224 = vsel %vm223, %v222, 0.0
        %225 = vadd.xlane.f32.xlu0 %v224
        %v226 = vpop.xlane.xlu0 %225
        %v227 = vrcp.pop 32.0
        %v228 = vmul.f32 32.0, %v227
        %v229 = vsub.f32 1.0, %v228
        %v230 = vmul.f32 %v227, %v229
        %v231 = vadd.f32 %v227, %v230
        %vm232 = vweird.f32 %v227
        %v233 = vsel %vm232, %v227, %v231
        %v234 = vmul.f32 %v226, %v233
        %v235 = vadd.f32 %v234, 1e-06
        %v236 = vrsqrt.pop %v235
        %v237 = vmul.f32 %v236, %v235
        %v238 = vmul.f32 %v237, %v236
        %v239 = vmul.f32 0.5, %v238
        %v240 = vsub.f32 1.5, %v239
        %v241 = vmul.f32 %v236, %v240
        %vm242 = vweird.f32 %v235
        %vm243 = vweird.f32 %v236
        %vm244 = vmor %vm242, %vm243
        %v245 = vsel %vm244, %v236, %v241
        %v246 = vmul.f32 %v221, %v245
        %v247 = vpack.c.bf16 %v246, %v246
        %v248 = vld [vmem:[%s1] sm:$0xf]
        %v249 = vld [vmem:[%s1 + $0x4] sm:$0xf]
        %v250 = vld [vmem:[%s1 + $0x8] sm:$0xf]
        %v251 = vld [vmem:[%s1 + $0xc] sm:$0xf]
        %v256 = vunpack.c.l.b16 %v248
        %v257 = vunpack.c.l.b16 %v249
        %v258 = vunpack.c.l.b16 %v250
        %v259 = vunpack.c.l.b16 %v251
        %v260 = vpack.c.b16 %v257, %v256
        %v261 = vpack.c.b16 %v259, %v258
        %v265 = vsel %vm223, %v247, 0
        %267 = vmatpush.bf16.msra.mxu0 0
        %268 = vmatpush.bf16.msra.mxu0 0
        %269 = vmatpush.bf16.msra.mxu0 0
        %270 = vmatpush.bf16.msra.mxu0 0
        %271 = vmatpush.bf16.msra.mxu0 0
        %272 = vmatpush.bf16.msra.mxu0 0
        %273 = vmatpush.bf16.msra.mxu0 %v261
        %274 = vmatpush.bf16.msra.mxu0 %v260
        %275 = vmatmul.bf16.gmra.mxu0 %v265
        %v276 = vpop.f32.mrf.mxu0
        %v277 = vadd.f32 0.0, %v276
        %v278 = vpop.f32.mrf.mxu0
        %279 = vdwg.mxu0
        %v280 = vmax.f32 %v277, 0.0
        %v281 = vpack.c.bf16 %v280, %v280
        %v282 = vld [vmem:[%s2] sm:$0xf]
        %v283 = vld [vmem:[%s2 + $0x4] sm:$0xf]
        %v284 = vld [vmem:[%s2 + $0x8] sm:$0xf]
        %v285 = vld [vmem:[%s2 + $0xc] sm:$0xf]
        %v286 = vld [vmem:[%s2 + $0x10] sm:$0xf]
        %v287 = vld [vmem:[%s2 + $0x14] sm:$0xf]
        %v288 = vld [vmem:[%s2 + $0x18] sm:$0xf]
        %v289 = vld [vmem:[%s2 + $0x1c] sm:$0xf]
        %v298 = vunpack.c.l.b16 %v282
        %v299 = vunpack.c.l.b16 %v283
        %v300 = vunpack.c.l.b16 %v284
        %v301 = vunpack.c.l.b16 %v285
        %v302 = vunpack.c.l.b16 %v286
        %v303 = vunpack.c.l.b16 %v287
        %v304 = vunpack.c.l.b16 %v288
        %v305 = vunpack.c.l.b16 %v289
        %v306 = vpack.c.b16 %v299, %v298
        %v307 = vpack.c.b16 %v301, %v300
        %v308 = vpack.c.b16 %v303, %v302
        %v309 = vpack.c.b16 %v305, %v304
        %vm314 = vcmask 523264
        %v316 = vsel %vm314, %v281, 0
        %318 = vmatpush.bf16.msra.mxu0 0
        %319 = vmatpush.bf16.msra.mxu0 0
        %320 = vmatpush.bf16.msra.mxu0 0
        %321 = vmatpush.bf16.msra.mxu0 0
        %322 = vmatpush.bf16.msra.mxu0 %v309
        %323 = vmatpush.bf16.msra.mxu0 %v308
        %324 = vmatpush.bf16.msra.mxu0 %v307
        %325 = vmatpush.bf16.msra.mxu0 %v306
        %326 = vmatmul.bf16.gmra.mxu0 %v316
        %v327 = vpop.f32.mrf.mxu0
        %v328 = vadd.f32 0.0, %v327
        %v329 = vpop.f32.mrf.mxu0
        %330 = vdwg.mxu0
        %v331 = vpack.c.bf16 %v328, %v328
        %v332 = vld [vmem:[%s3] sm:$0xf]
        %v333 = vld [vmem:[%s3 + $0x4] sm:$0xf]
        %v334 = vld [vmem:[%s3 + $0x8] sm:$0xf]
        %v335 = vld [vmem:[%s3 + $0xc] sm:$0xf]
        %v340 = vunpack.c.l.b16 %v332
        %v341 = vunpack.c.l.b16 %v333
        %v342 = vunpack.c.l.b16 %v334
        %v343 = vunpack.c.l.b16 %v335
        %v344 = vpack.c.b16 %v341, %v340
        %v345 = vpack.c.b16 %v343, %v342
        %v349 = vsel %vm223, %v331, 0
        %351 = vmatpush.bf16.msra.mxu0 0
        %352 = vmatpush.bf16.msra.mxu0 0
        %353 = vmatpush.bf16.msra.mxu0 0
        %354 = vmatpush.bf16.msra.mxu0 0
        %355 = vmatpush.bf16.msra.mxu0 0
        %356 = vmatpush.bf16.msra.mxu0 0
        %357 = vmatpush.bf16.msra.mxu0 %v345
        %358 = vmatpush.bf16.msra.mxu0 %v344
        %359 = vmatmul.bf16.gmra.mxu0 %v349
        %v360 = vpop.f32.mrf.mxu0
        %v361 = vadd.f32 0.0, %v360
        %v362 = vpop.f32.mrf.mxu0
        %363 = vdwg.mxu0
        %v364 = vmax.f32 %v361, 0.0
        %v365 = vpack.c.bf16 %v364, %v364
        %v366 = vld [vmem:[%s4] sm:$0xf]
        %v367 = vld [vmem:[%s4 + $0x4] sm:$0xf]
        %v368 = vld [vmem:[%s4 + $0x8] sm:$0xf]
        %v369 = vld [vmem:[%s4 + $0xc] sm:$0xf]
        %v370 = vld [vmem:[%s4 + $0x10] sm:$0xf]
        %v371 = vld [vmem:[%s4 + $0x14] sm:$0xf]
        %v372 = vld [vmem:[%s4 + $0x18] sm:$0xf]
        %v373 = vld [vmem:[%s4 + $0x1c] sm:$0xf]
        %v374 = vld [vmem:[%s4 + $0x20] sm:$0xf]
        %v375 = vld [vmem:[%s4 + $0x24] sm:$0xf]
        %v376 = vld [vmem:[%s4 + $0x28] sm:$0xf]
        %v377 = vld [vmem:[%s4 + $0x2c] sm:$0xf]
        %v378 = vld [vmem:[%s4 + $0x30] sm:$0xf]
        %v379 = vld [vmem:[%s4 + $0x34] sm:$0xf]
        %v380 = vld [vmem:[%s4 + $0x38] sm:$0xf]
        %v381 = vld [vmem:[%s4 + $0x3c] sm:$0xf]
        %v398 = vunpack.c.l.b16 %v366
        %v399 = vunpack.c.l.b16 %v367
        %v400 = vunpack.c.l.b16 %v368
        %v401 = vunpack.c.l.b16 %v369
        %v402 = vunpack.c.l.b16 %v370
        %v403 = vunpack.c.l.b16 %v371
        %v404 = vunpack.c.l.b16 %v372
        %v405 = vunpack.c.l.b16 %v373
        %v406 = vunpack.c.l.b16 %v374
        %v407 = vunpack.c.l.b16 %v375
        %v408 = vunpack.c.l.b16 %v376
        %v409 = vunpack.c.l.b16 %v377
        %v410 = vunpack.c.l.b16 %v378
        %v411 = vunpack.c.l.b16 %v379
        %v412 = vunpack.c.l.b16 %v380
        %v413 = vunpack.c.l.b16 %v381
        %v414 = vpack.c.b16 %v399, %v398
        %v415 = vpack.c.b16 %v401, %v400
        %v416 = vpack.c.b16 %v403, %v402
        %v417 = vpack.c.b16 %v405, %v404
        %v418 = vpack.c.b16 %v407, %v406
        %v419 = vpack.c.b16 %v409, %v408
        %v420 = vpack.c.b16 %v411, %v410
        %v421 = vpack.c.b16 %v413, %v412
        %430 = vmatpush.bf16.msra.mxu0 %v421
        %431 = vmatpush.bf16.msra.mxu0 %v420
        %432 = vmatpush.bf16.msra.mxu0 %v419
        %433 = vmatpush.bf16.msra.mxu0 %v418
        %434 = vmatpush.bf16.msra.mxu0 %v417
        %435 = vmatpush.bf16.msra.mxu0 %v416
        %436 = vmatpush.bf16.msra.mxu0 %v415
        %437 = vmatpush.bf16.msra.mxu0 %v414
        %438 = vmatmul.bf16.gmra.mxu0 %v365
        %v439 = vpop.f32.mrf.mxu0
        %v440 = vadd.f32 %v328, %v439
        %v441 = vpop.f32.mrf.mxu0
        %442 = vdwg.mxu0
        %v443 = vadd.f32 %v440, %v221
        %444 = vst.msk [vmem:[%s215] sm:$0xff] %vm223, %v443
        %s445 = sand.u32 %s137, 1
        %s446 = scalar_lea.sflag [#allocation3], %s445
        %s447 = sand.u32 %s137, 1
        %s448 = smul.addr %s447, 8
        %s449 = scalar_lea.vmem [#allocation2], %s448
        // Predicated region
        $region41: #{t5_adapter_layer_ff.1} parent=39 // pred_check
          %p450 = pneg %p147
        $region42: #{t5_adapter_layer_ff.1} parent=39 // pred_check_branch
          %452 = sbr.rel (%p450) target = $region44
        $region43: #{t5_adapter_layer_ff.1} parent=39 // pred_region
          %454 = vsyncadd %s446, 0
          %s455 = smul.addr %s19, 8
          %s456 = scalar_lea.hbm %s5, %s455
          %s458 = sshll.u32 %s449, 4
          %s459 = int_to_ptr.vmem [resolvable:$true] %s458
          %s460 = sshll.u32 %s456, 4
          %s461 = int_to_ptr.hbm [resolvable:$true] %s460
          %463 = dma.vmem_to_hbm [thread:$0]  %s459, 128, %s461, %s446
        $region44: #{t5_adapter_layer_ff.1} parent=39 // pred_fallthru
          _
      $region40: #{t5_adapter_layer_ff.1} parent=5 // pred_fallthru
        _
      %p464 = scmp.le.s32.totalorder 2, %s14
      // Predicated region
      $region45: #{t5_adapter_layer_ff.1} parent=5 // pred_check
        %p465 = pneg %p464
      $region46: #{t5_adapter_layer_ff.1} parent=5 // pred_check_branch
        %467 = sbr.rel (%p465) target = $region48
      $region47: #{t5_adapter_layer_ff.1} parent=5 // pred_region
        %s468 = ssub.s32 %s14, 2
        // Predicated region
        $region49: #{t5_adapter_layer_ff.1} parent=47 // pred_check
          %p469 = pneg %p153
        $region50: #{t5_adapter_layer_ff.1} parent=47 // pred_check_branch
          %471 = sbr.rel (%p469) target = $region52
        $region51: #{t5_adapter_layer_ff.1} parent=47 // pred_region
          %s472 = sand.u32 %s138, 1
          %s473 = scalar_lea.sflag [#allocation3], %s472
          %s474 = sand.u32 %s138, 1
          %s475 = smul.addr %s474, 8
          %s476 = scalar_lea.vmem [#allocation2], %s475
          %478 = dma.done %s473, 128
        $region52: #{t5_adapter_layer_ff.1} parent=47 // pred_fallthru
          _
      $region48: #{t5_adapter_layer_ff.1} parent=5 // pred_fallthru
        _
    $region6: #{t5_adapter_layer_ff.1} parent=1 // loop_footer
      %s18 = sadd.s32 1, %s14
    $region7: #{t5_adapter_layer_ff.1} parent=1 // loop_footer_branch
      %13 = sbr.rel target = $region3
    $region8: #{t5_adapter_layer_ff.1} parent=1 // loop_exit
      _
    %479 = vsyncpa [#allocation3], 1
    %s480 = scalar_lea.sflag [#allocation3], 1
    %481 = vsyncpa %s480, 1

</llo_original>
